<compile_context>
chip_gen: v7x
topology: tpu7x:2x2x1
jax: 0.10.0
libtpu: 0.0.40
codegen_flags: <defaults>
</compile_context>

<pallas_src>
import functools

import jax
import jax.numpy as jnp
from jax.experimental import pallas as pl
from jax.experimental.pallas import tpu as pltpu


def _round_up(n, m):
    return ((n + m - 1) // m) * m


def _linear_net_kernel(x_ref, w1_ref, b1_ref, w2_ref, b2_ref, w3_ref, b3_ref,
                       o_ref):
    x = x_ref[...]

    # fc1 + relu  (bias add / relu ride free VPU slots under the MXU)
    h1 = jnp.dot(x, w1_ref[...], preferred_element_type=jnp.float32)
    h1 = jnp.maximum(h1 + b1_ref[...], 0.0)

    # residual + relu(fc2)
    h2 = jnp.dot(h1, w2_ref[...], preferred_element_type=jnp.float32)
    h2 = h1 + jnp.maximum(h2 + b2_ref[...], 0.0)

    # out (lane-dense 128-padded output -> unmasked stores)
    y = jnp.dot(h2, w3_ref[...], preferred_element_type=jnp.float32)
    o_ref[...] = (y + b3_ref[...]).astype(o_ref.dtype)


def _pad2(a, rows, cols):
    """Zero-pad a 2-D array up to (rows, cols); no-op if already that shape."""
    r, c = a.shape
    if (r, c) == (rows, cols):
        return a
    return jnp.pad(a, ((0, rows - r), (0, cols - c)))


def linear_net_forward(x, params):
    """x: (B, input_dim) float32. params: dict of W1,b1,W2,b2,W3,b3."""
    w1, b1 = params["W1"], params["b1"]
    w2, b2 = params["W2"], params["b2"]
    w3, b3 = params["W3"], params["b3"]

    B, in_dim = x.shape
    hid_dim = w1.shape[1]
    out_dim = w3.shape[1]

    # ---- pad feature dims to the 128-lane vreg width ---------------------
    in_p = _round_up(in_dim, 128)
    hid_p = _round_up(hid_dim, 128)
    out_p = _round_up(out_dim, 128)

    # ---- pick batch tile (multiple of 8 sublanes, capped at 512 rows) ----
    TB = min(512, _round_up(B, 8))
    B_p = _round_up(B, TB)

    f32 = jnp.float32
    x_p = _pad2(x.astype(f32), B_p, in_p)
    w1_p = _pad2(w1, in_p, hid_p)
    b1_p = _pad2(b1, 1, hid_p)
    w2_p = _pad2(w2, hid_p, hid_p)
    b2_p = _pad2(b2, 1, hid_p)
    w3_p = _pad2(w3, hid_p, out_p)
    b3_p = _pad2(b3, 1, out_p)

    grid = (B_p // TB,)

    resident = lambda shape: pl.BlockSpec(shape, lambda i: (0, 0))

    # Advisory cost estimate (logical, un-padded sizes).
    flops = 2 * B * (in_dim * hid_dim + hid_dim * hid_dim + hid_dim * out_dim)
    bytes_accessed = 4 * (B * in_dim + B * out_dim +
                          in_dim * hid_dim + hid_dim * hid_dim +
                          hid_dim * out_dim + 2 * hid_dim + out_dim)

    y_p = pl.pallas_call(
        _linear_net_kernel,
        out_shape=jax.ShapeDtypeStruct((B_p, out_p), f32),
        grid_spec=pltpu.PrefetchScalarGridSpec(
            num_scalar_prefetch=0,
            grid=grid,
            in_specs=[
                pl.BlockSpec((TB, in_p), lambda i: (i, 0)),   # x tile
                resident((in_p, hid_p)),                      # W1
                resident((1, hid_p)),                         # b1
                resident((hid_p, hid_p)),                     # W2
                resident((1, hid_p)),                         # b2
                resident((hid_p, out_p)),                     # W3
                resident((1, out_p)),                         # b3
            ],
            out_specs=pl.BlockSpec((TB, out_p), lambda i: (i, 0)),
        ),
        compiler_params=pltpu.CompilerParams(
            dimension_semantics=("parallel",),
            # Resident weights (<1 MiB at 128-padded DQN sizes) + double-
            # buffered (TB x in_p + TB x out_p) f32 tiles fit well under the
            # v7x 64 MiB physical VMEM.
            vmem_limit_bytes=32 * 1024 * 1024,
        ),
        cost_estimate=pl.CostEstimate(
            flops=flops, transcendentals=0, bytes_accessed=bytes_accessed),
    )(x_p, w1_p, b1_p, w2_p, b2_p, w3_p, b3_p)

    return y_p[:B, :out_dim]


def init_params(key, input_dim, output_dim, hidden_dim):
    """Deterministic init matching the shapes of Linear_Net.__init__."""
    ks = jax.random.split(key, 6)

    def uniform_linear(kw, kb, fan_in, fan_out):
        # PyTorch-style U(-1/sqrt(fan_in), 1/sqrt(fan_in))
        bound = 1.0 / jnp.sqrt(jnp.float32(fan_in))
        w = jax.random.uniform(kw, (fan_in, fan_out), jnp.float32,
                               minval=-bound, maxval=bound)
        b = jax.random.uniform(kb, (1, fan_out), jnp.float32,
                               minval=-bound, maxval=bound)
        return w, b

    W1, b1 = uniform_linear(ks[0], ks[1], input_dim, hidden_dim)
    W2, b2 = uniform_linear(ks[2], ks[3], hidden_dim, hidden_dim)
    W3, b3 = uniform_linear(ks[4], ks[5], hidden_dim, output_dim)
    return {"W1": W1, "b1": b1, "W2": W2, "b2": b2, "W3": W3, "b3": b3}


def linear_net_ref(x, p):
    h1 = jax.nn.relu(x @ p["W1"] + p["b1"])
    h2 = h1 + jax.nn.relu(h1 @ p["W2"] + p["b2"])
    return h2 @ p["W3"] + p["b3"]


if __name__ == "__main__":
    key = jax.random.PRNGKey(0)
    k_x, k_p = jax.random.split(key)

    batch, input_dim, hidden_dim, output_dim = 8, 16, 32, 4

    x = jax.random.normal(k_x, (batch, input_dim), jnp.float32)
    params = init_params(k_p, input_dim, output_dim, hidden_dim)

    fwd = jax.jit(functools.partial(linear_net_forward))
    y = fwd(x, params)
    y = jax.block_until_ready(y)

    y_ref = linear_net_ref(x, params)
    assert y.shape == (batch, output_dim)
    assert jnp.allclose(y, y_ref, atol=1e-5, rtol=1e-5), "mismatch vs reference"

    print("KERNEL_OK")
</pallas_src>

<mosaic_0001>
module attributes {stable_mosaic.version = 11 : i64} {
  func.func @_linear_net_kernel(%arg0: i32, %arg1: memref<8x128xf32, #tpu.memory_space<vmem>>, %arg2: memref<128x128xf32, #tpu.memory_space<vmem>>, %arg3: memref<1x128xf32, #tpu.memory_space<vmem>>, %arg4: memref<128x128xf32, #tpu.memory_space<vmem>>, %arg5: memref<1x128xf32, #tpu.memory_space<vmem>>, %arg6: memref<128x128xf32, #tpu.memory_space<vmem>>, %arg7: memref<1x128xf32, #tpu.memory_space<vmem>>, %arg8: memref<8x128xf32, #tpu.memory_space<vmem>>) attributes {dimension_semantics = [#tpu.dimension_semantics<parallel>], iteration_bounds = array<i64: 1>, scalar_prefetch = 0 : i64, scratch_operands = 0 : i64, tpu.core_type = #tpu.core_type<tc>, window_params = [{transform_indices = @transform_0, window_bounds = array<i64: 8, 128>}, {pipeline_mode = #tpu.pipeline_mode<synchronous>, transform_indices = @transform_1, window_bounds = array<i64: 128, 128>}, {pipeline_mode = #tpu.pipeline_mode<synchronous>, transform_indices = @transform_2, window_bounds = array<i64: 1, 128>}, {pipeline_mode = #tpu.pipeline_mode<synchronous>, transform_indices = @transform_3, window_bounds = array<i64: 128, 128>}, {pipeline_mode = #tpu.pipeline_mode<synchronous>, transform_indices = @transform_4, window_bounds = array<i64: 1, 128>}, {pipeline_mode = #tpu.pipeline_mode<synchronous>, transform_indices = @transform_5, window_bounds = array<i64: 128, 128>}, {pipeline_mode = #tpu.pipeline_mode<synchronous>, transform_indices = @transform_6, window_bounds = array<i64: 1, 128>}, {transform_indices = @transform_7, window_bounds = array<i64: 8, 128>}]} {
    %c0 = arith.constant 0 : index
    %c0_0 = arith.constant 0 : index
    %0 = vector.load %arg1[%c0, %c0_0] : memref<8x128xf32, #tpu.memory_space<vmem>>, vector<8x128xf32>
    %c0_1 = arith.constant 0 : index
    %c0_2 = arith.constant 0 : index
    %1 = vector.load %arg2[%c0_1, %c0_2] : memref<128x128xf32, #tpu.memory_space<vmem>>, vector<128x128xf32>
    %cst = arith.constant dense<0.000000e+00> : vector<8x128xf32>
    %2 = tpu.matmul %0, %1, %cst {dimension_numbers = #tpu.dot_dimension_numbers<[1], [0], [0], [1], [0, 0, 1, 1], [], []>} : vector<8x128xf32>, vector<128x128xf32>, vector<8x128xf32> -> vector<8x128xf32>
    %c0_3 = arith.constant 0 : index
    %c0_4 = arith.constant 0 : index
    %3 = vector.load %arg3[%c0_3, %c0_4] : memref<1x128xf32, #tpu.memory_space<vmem>>, vector<1x128xf32>
    %4 = vector.broadcast %3 : vector<1x128xf32> to vector<8x128xf32>
    %5 = arith.addf %2, %4 : vector<8x128xf32>
    %cst_5 = arith.constant 0.000000e+00 : f32
    %6 = vector.broadcast %cst_5 : f32 to vector<8x128xf32>
    %7 = arith.maximumf %5, %6 : vector<8x128xf32>
    %c0_6 = arith.constant 0 : index
    %c0_7 = arith.constant 0 : index
    %8 = vector.load %arg4[%c0_6, %c0_7] : memref<128x128xf32, #tpu.memory_space<vmem>>, vector<128x128xf32>
    %cst_8 = arith.constant dense<0.000000e+00> : vector<8x128xf32>
    %9 = tpu.matmul %7, %8, %cst_8 {dimension_numbers = #tpu.dot_dimension_numbers<[1], [0], [0], [1], [0, 0, 1, 1], [], []>} : vector<8x128xf32>, vector<128x128xf32>, vector<8x128xf32> -> vector<8x128xf32>
    %c0_9 = arith.constant 0 : index
    %c0_10 = arith.constant 0 : index
    %10 = vector.load %arg5[%c0_9, %c0_10] : memref<1x128xf32, #tpu.memory_space<vmem>>, vector<1x128xf32>
    %11 = vector.broadcast %10 : vector<1x128xf32> to vector<8x128xf32>
    %12 = arith.addf %9, %11 : vector<8x128xf32>
    %cst_11 = arith.constant 0.000000e+00 : f32
    %13 = vector.broadcast %cst_11 : f32 to vector<8x128xf32>
    %14 = arith.maximumf %12, %13 : vector<8x128xf32>
    %15 = arith.addf %7, %14 : vector<8x128xf32>
    %c0_12 = arith.constant 0 : index
    %c0_13 = arith.constant 0 : index
    %16 = vector.load %arg6[%c0_12, %c0_13] : memref<128x128xf32, #tpu.memory_space<vmem>>, vector<128x128xf32>
    %cst_14 = arith.constant dense<0.000000e+00> : vector<8x128xf32>
    %17 = tpu.matmul %15, %16, %cst_14 {dimension_numbers = #tpu.dot_dimension_numbers<[1], [0], [0], [1], [0, 0, 1, 1], [], []>} : vector<8x128xf32>, vector<128x128xf32>, vector<8x128xf32> -> vector<8x128xf32>
    %c0_15 = arith.constant 0 : index
    %c0_16 = arith.constant 0 : index
    %18 = vector.load %arg7[%c0_15, %c0_16] : memref<1x128xf32, #tpu.memory_space<vmem>>, vector<1x128xf32>
    %19 = vector.broadcast %18 : vector<1x128xf32> to vector<8x128xf32>
    %20 = arith.addf %17, %19 : vector<8x128xf32>
    %c0_17 = arith.constant 0 : index
    %c0_18 = arith.constant 0 : index
    %21 = vector.load %arg8[%c0_17, %c0_18] : memref<8x128xf32, #tpu.memory_space<vmem>>, vector<8x128xf32>
    tpu.vector_store %arg8[%c0_17, %c0_18], %20 {strides = array<i32>} : memref<8x128xf32, #tpu.memory_space<vmem>>, vector<8x128xf32>,
    return
  }
  func.func @transform_0(%arg0: i32) -> (i32, i32) {
    %c0_i32 = arith.constant 0 : i32
    %c0_i32_0 = arith.constant 0 : i32
    return %arg0, %c0_i32 : i32, i32
  }
  func.func @transform_1(%arg0: i32) -> (i32, i32) {
    %c0_i32 = arith.constant 0 : i32
    %c0_i32_0 = arith.constant 0 : i32
    %c0_i32_1 = arith.constant 0 : i32
    return %c0_i32, %c0_i32_0 : i32, i32
  }
  func.func @transform_2(%arg0: i32) -> (i32, i32) {
    %c0_i32 = arith.constant 0 : i32
    %c0_i32_0 = arith.constant 0 : i32
    %c0_i32_1 = arith.constant 0 : i32
    return %c0_i32, %c0_i32_0 : i32, i32
  }
  func.func @transform_3(%arg0: i32) -> (i32, i32) {
    %c0_i32 = arith.constant 0 : i32
    %c0_i32_0 = arith.constant 0 : i32
    %c0_i32_1 = arith.constant 0 : i32
    return %c0_i32, %c0_i32_0 : i32, i32
  }
  func.func @transform_4(%arg0: i32) -> (i32, i32) {
    %c0_i32 = arith.constant 0 : i32
    %c0_i32_0 = arith.constant 0 : i32
    %c0_i32_1 = arith.constant 0 : i32
    return %c0_i32, %c0_i32_0 : i32, i32
  }
  func.func @transform_5(%arg0: i32) -> (i32, i32) {
    %c0_i32 = arith.constant 0 : i32
    %c0_i32_0 = arith.constant 0 : i32
    %c0_i32_1 = arith.constant 0 : i32
    return %c0_i32, %c0_i32_0 : i32, i32
  }
  func.func @transform_6(%arg0: i32) -> (i32, i32) {
    %c0_i32 = arith.constant 0 : i32
    %c0_i32_0 = arith.constant 0 : i32
    %c0_i32_1 = arith.constant 0 : i32
    return %c0_i32, %c0_i32_0 : i32, i32
  }
  func.func @transform_7(%arg0: i32) -> (i32, i32) {
    %c0_i32 = arith.constant 0 : i32
    %c0_i32_0 = arith.constant 0 : i32
    return %arg0, %c0_i32 : i32, i32
  }
}

</mosaic_0001>

<llo_original>
// kernel: linear_net_forward.1
$region0: #{linear_net_forward.1}
  #allocation0 [shape = 'u32[]', space=smem, size = 0x4, offset = 0x4, fixed_abs, tag = 'smem constant byte address 0x4 - core index']
  #allocation1 [shape = 'u32[144,128]{1,0:T(1,128)}', space=vmem, size = 0x12000, scoped, tag = 'internal scratch']
  %s0 = inlined_call_operand.vmem [shape: f32[8,128], index: 0, kind: input, shape index: {}]
  %s1 = inlined_call_operand.vmem [shape: f32[128,128], index: 1, kind: input, shape index: {}]
  %s2 = inlined_call_operand.vmem [shape: f32[1,128], index: 2, kind: input, shape index: {}]
  %s3 = inlined_call_operand.vmem [shape: f32[128,128], index: 3, kind: input, shape index: {}]
  %s4 = inlined_call_operand.vmem [shape: f32[1,128], index: 4, kind: input, shape index: {}]
  %s5 = inlined_call_operand.vmem [shape: f32[128,128], index: 5, kind: input, shape index: {}]
  %s6 = inlined_call_operand.vmem [shape: f32[1,128], index: 6, kind: input, shape index: {}]
  %s7 = inlined_call_operand.vmem [shape: f32[8,128], index: 7, kind: output, shape index: {}]
  %s8 = sld [smem:[#allocation0]]
  $region38: #{linear_net_forward.1} parent=0
    _
  %s10 = ssub.s32 1, %s8
  %s11 = scalar_select 0, %s10, %s8
  // Predicated region
  $region2: #{linear_net_forward.1} parent=0 // pred_check
    _
  $region3: #{linear_net_forward.1} parent=0 // pred_check_branch
    %13 = sbr.rel (0) target = $region5
  $region4: #{linear_net_forward.1} parent=0 // pred_region
    _
  $region5: #{linear_net_forward.1} parent=0 // pred_fallthru
    _
  // Predicated region
  $region6: #{linear_net_forward.1} parent=0 // pred_check
    _
  $region7: #{linear_net_forward.1} parent=0 // pred_check_branch
    %15 = sbr.rel (0) target = $region9
  $region8: #{linear_net_forward.1} parent=0 // pred_region
    _
  $region9: #{linear_net_forward.1} parent=0 // pred_fallthru
    _
  // Predicated region
  $region10: #{linear_net_forward.1} parent=0 // pred_check
    _
  $region11: #{linear_net_forward.1} parent=0 // pred_check_branch
    %17 = sbr.rel (0) target = $region13
  $region12: #{linear_net_forward.1} parent=0 // pred_region
    _
  $region13: #{linear_net_forward.1} parent=0 // pred_fallthru
    _
  // Predicated region
  $region14: #{linear_net_forward.1} parent=0 // pred_check
    _
  $region15: #{linear_net_forward.1} parent=0 // pred_check_branch
    %19 = sbr.rel (0) target = $region17
  $region16: #{linear_net_forward.1} parent=0 // pred_region
    _
  $region17: #{linear_net_forward.1} parent=0 // pred_fallthru
    _
  // Predicated region
  $region18: #{linear_net_forward.1} parent=0 // pred_check
    _
  $region19: #{linear_net_forward.1} parent=0 // pred_check_branch
    %21 = sbr.rel (0) target = $region21
  $region20: #{linear_net_forward.1} parent=0 // pred_region
    _
  $region21: #{linear_net_forward.1} parent=0 // pred_fallthru
    _
  // Predicated region
  $region22: #{linear_net_forward.1} parent=0 // pred_check
    _
  $region23: #{linear_net_forward.1} parent=0 // pred_check_branch
    %23 = sbr.rel (0) target = $region25
  $region24: #{linear_net_forward.1} parent=0 // pred_region
    _
  $region25: #{linear_net_forward.1} parent=0 // pred_fallthru
    _
  // Predicated region
  $region26: #{linear_net_forward.1} parent=0 // pred_check
    _
  $region27: #{linear_net_forward.1} parent=0 // pred_check_branch
    %25 = sbr.rel (0) target = $region29
  $region28: #{linear_net_forward.1} parent=0 // pred_region
    _
  $region29: #{linear_net_forward.1} parent=0 // pred_fallthru
    _
  %v26 = vld [vmem:[%s0] sm:$0xff]
  %v27 = vld [vmem:[%s1] sm:$0xff]
  %v28 = vld [vmem:[%s1 + $0x8] sm:$0xff]
  %v29 = vld [vmem:[%s1 + $0x10] sm:$0xff]
  %v30 = vld [vmem:[%s1 + $0x18] sm:$0xff]
  %v31 = vld [vmem:[%s1 + $0x20] sm:$0xff]
  %v32 = vld [vmem:[%s1 + $0x28] sm:$0xff]
  %v33 = vld [vmem:[%s1 + $0x30] sm:$0xff]
  %v34 = vld [vmem:[%s1 + $0x38] sm:$0xff]
  %v35 = vld [vmem:[%s1 + $0x40] sm:$0xff]
  %v36 = vld [vmem:[%s1 + $0x48] sm:$0xff]
  %v37 = vld [vmem:[%s1 + $0x50] sm:$0xff]
  %v38 = vld [vmem:[%s1 + $0x58] sm:$0xff]
  %v39 = vld [vmem:[%s1 + $0x60] sm:$0xff]
  %v40 = vld [vmem:[%s1 + $0x68] sm:$0xff]
  %v41 = vld [vmem:[%s1 + $0x70] sm:$0xff]
  %v42 = vld [vmem:[%s1 + $0x78] sm:$0xff]
  %v43 = vld [vmem:[%s2] sm:$0x1]
  %v45 = vlaneseq
  %v46 = vshrl.u32 %v45, 7
  %v47 = vsub.s32 0, %v46
  %v48 = vrot.slane %v43, %v47
  %50 = vmatprep.subr.mxu0 0.0
  %51 = vmatpush1.msra.mxu0 %v27
  %52 = vmatprep.subr.mxu0 0.0
  %53 = vmatpush1.msra.mxu0 %v28
  %54 = vmatprep.subr.mxu0 0.0
  %55 = vmatpush1.msra.mxu0 %v29
  %56 = vmatprep.subr.mxu0 0.0
  %57 = vmatpush1.msra.mxu0 %v30
  %58 = vmatprep.subr.mxu0 0.0
  %59 = vmatpush1.msra.mxu0 %v31
  %60 = vmatprep.subr.mxu0 0.0
  %61 = vmatpush1.msra.mxu0 %v32
  %62 = vmatprep.subr.mxu0 0.0
  %63 = vmatpush1.msra.mxu0 %v33
  %64 = vmatprep.subr.mxu0 0.0
  %65 = vmatpush1.msra.mxu0 %v34
  %66 = vmatprep.subr.mxu0 0.0
  %67 = vmatpush1.msra.mxu0 %v35
  %68 = vmatprep.subr.mxu0 0.0
  %69 = vmatpush1.msra.mxu0 %v36
  %70 = vmatprep.subr.mxu0 0.0
  %71 = vmatpush1.msra.mxu0 %v37
  %72 = vmatprep.subr.mxu0 0.0
  %73 = vmatpush1.msra.mxu0 %v38
  %74 = vmatprep.subr.mxu0 0.0
  %75 = vmatpush1.msra.mxu0 %v39
  %76 = vmatprep.subr.mxu0 0.0
  %77 = vmatpush1.msra.mxu0 %v40
  %78 = vmatprep.subr.mxu0 0.0
  %79 = vmatpush1.msra.mxu0 %v41
  %80 = vmatprep.subr.mxu0 0.0
  %81 = vmatpush1.msra.mxu0 %v42
  %82 = vmatprep.subr.mxu0 0.0
  %83 = vmatpush1.msra.mxu0 0.0
  %84 = vmatprep.subr.mxu0 0.0
  %85 = vmatpush1.msra.mxu0 0.0
  %86 = vmatprep.subr.mxu0 0.0
  %87 = vmatpush1.msra.mxu0 0.0
  %88 = vmatprep.subr.mxu0 0.0
  %89 = vmatpush1.msra.mxu0 0.0
  %90 = vmatprep.subr.mxu0 0.0
  %91 = vmatpush1.msra.mxu0 0.0
  %92 = vmatprep.subr.mxu0 0.0
  %93 = vmatpush1.msra.mxu0 0.0
  %94 = vmatprep.subr.mxu0 0.0
  %95 = vmatpush1.msra.mxu0 0.0
  %96 = vmatprep.subr.mxu0 0.0
  %97 = vmatpush1.msra.mxu0 0.0
  %98 = vmatprep.subr.mxu0 0.0
  %99 = vmatpush1.msra.mxu0 0.0
  %100 = vmatprep.subr.mxu0 0.0
  %101 = vmatpush1.msra.mxu0 0.0
  %102 = vmatprep.subr.mxu0 0.0
  %103 = vmatpush1.msra.mxu0 0.0
  %104 = vmatprep.subr.mxu0 0.0
  %105 = vmatpush1.msra.mxu0 0.0
  %106 = vmatprep.subr.mxu0 0.0
  %107 = vmatpush1.msra.mxu0 0.0
  %108 = vmatprep.subr.mxu0 0.0
  %109 = vmatpush1.msra.mxu0 0.0
  %110 = vmatprep.subr.mxu0 0.0
  %111 = vmatpush1.msra.mxu0 0.0
  %112 = vmatprep.subr.mxu0 0.0
  %113 = vmatpush1.msra.mxu0 0.0
  %114 = vmatprep.mubr.f32.mxu0 0.0
  %115 = vmatmul.mubr.f32.gmra.mrb[0].mxu0 %v26
  %v116 = vpop.f32.mrb[0].mxu0
  %v117 = vadd.f32 %v48, %v116
  %v118 = vpop.f32.mrb[0].mxu0
  %119 = vdwg.mxu0
  %v120 = vmax.f32 %v117, 0.0
  %v121 = vld [vmem:[%s3] sm:$0xff]
  %v122 = vld [vmem:[%s3 + $0x8] sm:$0xff]
  %v123 = vld [vmem:[%s3 + $0x10] sm:$0xff]
  %v124 = vld [vmem:[%s3 + $0x18] sm:$0xff]
  %v125 = vld [vmem:[%s3 + $0x20] sm:$0xff]
  %v126 = vld [vmem:[%s3 + $0x28] sm:$0xff]
  %v127 = vld [vmem:[%s3 + $0x30] sm:$0xff]
  %v128 = vld [vmem:[%s3 + $0x38] sm:$0xff]
  %v129 = vld [vmem:[%s3 + $0x40] sm:$0xff]
  %v130 = vld [vmem:[%s3 + $0x48] sm:$0xff]
  %v131 = vld [vmem:[%s3 + $0x50] sm:$0xff]
  %v132 = vld [vmem:[%s3 + $0x58] sm:$0xff]
  %v133 = vld [vmem:[%s3 + $0x60] sm:$0xff]
  %v134 = vld [vmem:[%s3 + $0x68] sm:$0xff]
  %v135 = vld [vmem:[%s3 + $0x70] sm:$0xff]
  %v136 = vld [vmem:[%s3 + $0x78] sm:$0xff]
  %v137 = vld [vmem:[%s4] sm:$0x1]
  %v139 = vlaneseq
  %v140 = vshrl.u32 %v139, 7
  %v141 = vsub.s32 0, %v140
  %v142 = vrot.slane %v137, %v141
  %144 = vmatprep.subr.mxu0 0.0
  %145 = vmatpush1.msra.mxu0 %v121
  %146 = vmatprep.subr.mxu0 0.0
  %147 = vmatpush1.msra.mxu0 %v122
  %148 = vmatprep.subr.mxu0 0.0
  %149 = vmatpush1.msra.mxu0 %v123
  %150 = vmatprep.subr.mxu0 0.0
  %151 = vmatpush1.msra.mxu0 %v124
  %152 = vmatprep.subr.mxu0 0.0
  %153 = vmatpush1.msra.mxu0 %v125
  %154 = vmatprep.subr.mxu0 0.0
  %155 = vmatpush1.msra.mxu0 %v126
  %156 = vmatprep.subr.mxu0 0.0
  %157 = vmatpush1.msra.mxu0 %v127
  %158 = vmatprep.subr.mxu0 0.0
  %159 = vmatpush1.msra.mxu0 %v128
  %160 = vmatprep.subr.mxu0 0.0
  %161 = vmatpush1.msra.mxu0 %v129
  %162 = vmatprep.subr.mxu0 0.0
  %163 = vmatpush1.msra.mxu0 %v130
  %164 = vmatprep.subr.mxu0 0.0
  %165 = vmatpush1.msra.mxu0 %v131
  %166 = vmatprep.subr.mxu0 0.0
  %167 = vmatpush1.msra.mxu0 %v132
  %168 = vmatprep.subr.mxu0 0.0
  %169 = vmatpush1.msra.mxu0 %v133
  %170 = vmatprep.subr.mxu0 0.0
  %171 = vmatpush1.msra.mxu0 %v134
  %172 = vmatprep.subr.mxu0 0.0
  %173 = vmatpush1.msra.mxu0 %v135
  %174 = vmatprep.subr.mxu0 0.0
  %175 = vmatpush1.msra.mxu0 %v136
  %176 = vmatprep.subr.mxu0 0.0
  %177 = vmatpush1.msra.mxu0 0.0
  %178 = vmatprep.subr.mxu0 0.0
  %179 = vmatpush1.msra.mxu0 0.0
  %180 = vmatprep.subr.mxu0 0.0
  %181 = vmatpush1.msra.mxu0 0.0
  %182 = vmatprep.subr.mxu0 0.0
  %183 = vmatpush1.msra.mxu0 0.0
  %184 = vmatprep.subr.mxu0 0.0
  %185 = vmatpush1.msra.mxu0 0.0
  %186 = vmatprep.subr.mxu0 0.0
  %187 = vmatpush1.msra.mxu0 0.0
  %188 = vmatprep.subr.mxu0 0.0
  %189 = vmatpush1.msra.mxu0 0.0
  %190 = vmatprep.subr.mxu0 0.0
  %191 = vmatpush1.msra.mxu0 0.0
  %192 = vmatprep.subr.mxu0 0.0
  %193 = vmatpush1.msra.mxu0 0.0
  %194 = vmatprep.subr.mxu0 0.0
  %195 = vmatpush1.msra.mxu0 0.0
  %196 = vmatprep.subr.mxu0 0.0
  %197 = vmatpush1.msra.mxu0 0.0
  %198 = vmatprep.subr.mxu0 0.0
  %199 = vmatpush1.msra.mxu0 0.0
  %200 = vmatprep.subr.mxu0 0.0
  %201 = vmatpush1.msra.mxu0 0.0
  %202 = vmatprep.subr.mxu0 0.0
  %203 = vmatpush1.msra.mxu0 0.0
  %204 = vmatprep.subr.mxu0 0.0
  %205 = vmatpush1.msra.mxu0 0.0
  %206 = vmatprep.subr.mxu0 0.0
  %207 = vmatpush1.msra.mxu0 0.0
  %208 = vmatprep.mubr.f32.mxu0 0.0
  %209 = vmatmul.mubr.f32.gmra.mrb[0].mxu0 %v120
  %v210 = vpop.f32.mrb[0].mxu0
  %v211 = vadd.f32 %v142, %v210
  %v212 = vpop.f32.mrb[0].mxu0
  %213 = vdwg.mxu0
  %v214 = vmax.f32 %v211, 0.0
  %v215 = vadd.f32 %v120, %v214
  %v216 = vld [vmem:[%s5] sm:$0xff]
  %v217 = vld [vmem:[%s5 + $0x8] sm:$0xff]
  %v218 = vld [vmem:[%s5 + $0x10] sm:$0xff]
  %v219 = vld [vmem:[%s5 + $0x18] sm:$0xff]
  %v220 = vld [vmem:[%s5 + $0x20] sm:$0xff]
  %v221 = vld [vmem:[%s5 + $0x28] sm:$0xff]
  %v222 = vld [vmem:[%s5 + $0x30] sm:$0xff]
  %v223 = vld [vmem:[%s5 + $0x38] sm:$0xff]
  %v224 = vld [vmem:[%s5 + $0x40] sm:$0xff]
  %v225 = vld [vmem:[%s5 + $0x48] sm:$0xff]
  %v226 = vld [vmem:[%s5 + $0x50] sm:$0xff]
  %v227 = vld [vmem:[%s5 + $0x58] sm:$0xff]
  %v228 = vld [vmem:[%s5 + $0x60] sm:$0xff]
  %v229 = vld [vmem:[%s5 + $0x68] sm:$0xff]
  %v230 = vld [vmem:[%s5 + $0x70] sm:$0xff]
  %v231 = vld [vmem:[%s5 + $0x78] sm:$0xff]
  %v232 = vld [vmem:[%s6] sm:$0x1]
  %v234 = vlaneseq
  %v235 = vshrl.u32 %v234, 7
  %v236 = vsub.s32 0, %v235
  %v237 = vrot.slane %v232, %v236
  %239 = vmatprep.subr.mxu0 0.0
  %240 = vmatpush1.msra.mxu0 %v216
  %241 = vmatprep.subr.mxu0 0.0
  %242 = vmatpush1.msra.mxu0 %v217
  %243 = vmatprep.subr.mxu0 0.0
  %244 = vmatpush1.msra.mxu0 %v218
  %245 = vmatprep.subr.mxu0 0.0
  %246 = vmatpush1.msra.mxu0 %v219
  %247 = vmatprep.subr.mxu0 0.0
  %248 = vmatpush1.msra.mxu0 %v220
  %249 = vmatprep.subr.mxu0 0.0
  %250 = vmatpush1.msra.mxu0 %v221
  %251 = vmatprep.subr.mxu0 0.0
  %252 = vmatpush1.msra.mxu0 %v222
  %253 = vmatprep.subr.mxu0 0.0
  %254 = vmatpush1.msra.mxu0 %v223
  %255 = vmatprep.subr.mxu0 0.0
  %256 = vmatpush1.msra.mxu0 %v224
  %257 = vmatprep.subr.mxu0 0.0
  %258 = vmatpush1.msra.mxu0 %v225
  %259 = vmatprep.subr.mxu0 0.0
  %260 = vmatpush1.msra.mxu0 %v226
  %261 = vmatprep.subr.mxu0 0.0
  %262 = vmatpush1.msra.mxu0 %v227
  %263 = vmatprep.subr.mxu0 0.0
  %264 = vmatpush1.msra.mxu0 %v228
  %265 = vmatprep.subr.mxu0 0.0
  %266 = vmatpush1.msra.mxu0 %v229
  %267 = vmatprep.subr.mxu0 0.0
  %268 = vmatpush1.msra.mxu0 %v230
  %269 = vmatprep.subr.mxu0 0.0
  %270 = vmatpush1.msra.mxu0 %v231
  %271 = vmatprep.subr.mxu0 0.0
  %272 = vmatpush1.msra.mxu0 0.0
  %273 = vmatprep.subr.mxu0 0.0
  %274 = vmatpush1.msra.mxu0 0.0
  %275 = vmatprep.subr.mxu0 0.0
  %276 = vmatpush1.msra.mxu0 0.0
  %277 = vmatprep.subr.mxu0 0.0
  %278 = vmatpush1.msra.mxu0 0.0
  %279 = vmatprep.subr.mxu0 0.0
  %280 = vmatpush1.msra.mxu0 0.0
  %281 = vmatprep.subr.mxu0 0.0
  %282 = vmatpush1.msra.mxu0 0.0
  %283 = vmatprep.subr.mxu0 0.0
  %284 = vmatpush1.msra.mxu0 0.0
  %285 = vmatprep.subr.mxu0 0.0
  %286 = vmatpush1.msra.mxu0 0.0
  %287 = vmatprep.subr.mxu0 0.0
  %288 = vmatpush1.msra.mxu0 0.0
  %289 = vmatprep.subr.mxu0 0.0
  %290 = vmatpush1.msra.mxu0 0.0
  %291 = vmatprep.subr.mxu0 0.0
  %292 = vmatpush1.msra.mxu0 0.0
  %293 = vmatprep.subr.mxu0 0.0
  %294 = vmatpush1.msra.mxu0 0.0
  %295 = vmatprep.subr.mxu0 0.0
  %296 = vmatpush1.msra.mxu0 0.0
  %297 = vmatprep.subr.mxu0 0.0
  %298 = vmatpush1.msra.mxu0 0.0
  %299 = vmatprep.subr.mxu0 0.0
  %300 = vmatpush1.msra.mxu0 0.0
  %301 = vmatprep.subr.mxu0 0.0
  %302 = vmatpush1.msra.mxu0 0.0
  %303 = vmatprep.mubr.f32.mxu0 0.0
  %304 = vmatmul.mubr.f32.gmra.mrb[0].mxu0 %v215
  %v305 = vpop.f32.mrb[0].mxu0
  %v306 = vadd.f32 %v237, %v305
  %v307 = vpop.f32.mrb[0].mxu0
  %308 = vdwg.mxu0
  %309 = vst [vmem:[%s7] sm:$0xff] %v306
  // Predicated region
  $region30: #{linear_net_forward.1} parent=0 // pred_check
    _
  $region31: #{linear_net_forward.1} parent=0 // pred_check_branch
    %311 = sbr.rel (0) target = $region33
  $region32: #{linear_net_forward.1} parent=0 // pred_region
    _
  $region33: #{linear_net_forward.1} parent=0 // pred_fallthru
    _
  // Predicated region
  $region34: #{linear_net_forward.1} parent=0 // pred_check
    _
  $region35: #{linear_net_forward.1} parent=0 // pred_check_branch
    %313 = sbr.rel (0) target = $region37
  $region36: #{linear_net_forward.1} parent=0 // pred_region
    _
  $region37: #{linear_net_forward.1} parent=0 // pred_fallthru
    _

</llo_original>
